<compile_context>
chip_gen: v7x
topology: tpu7x:2x2x1
jax: 0.10.0
libtpu: 0.0.40
codegen_flags: <defaults>
</compile_context>

<pallas_src>
import functools

import jax
import jax.numpy as jnp
from jax.experimental import pallas as pl
from jax.experimental.pallas import tpu as pltpu


def _round_up(x, m):
    return ((x + m - 1) // m) * m


def _pad2d(x, target_shape):
    pads = [(0, t - s) for s, t in zip(x.shape, target_shape)]
    if any(p[1] for p in pads):
        x = jnp.pad(x, pads)
    return x


def _vmem_capacity_bytes():
    try:
        return int(pltpu.get_tpu_info().vmem_capacity_bytes)
    except Exception:
        return 64 * 2**20  # conservative: v7x per-TC VMEM


# ----------------------------- Pallas kernels ------------------------------ #
def _mlp_kernel_single(*refs, activation, use_bias):
    """Whole K in one block: out = act(x @ w + b), no scratch."""
    if use_bias:
        x_ref, w_ref, b_ref, o_ref = refs
    else:
        x_ref, w_ref, o_ref = refs
        b_ref = None

    y = jnp.dot(x_ref[...], w_ref[...], preferred_element_type=jnp.float32)
    if use_bias:
        y = y + b_ref[...].astype(jnp.float32)
    o_ref[...] = activation(y).astype(o_ref.dtype)


def _mlp_kernel_ktiled(*refs, activation, use_bias, use_scratch):
    """K-tiled path: f32 accumulation (scratch, or o_ref itself when f32)."""
    if use_bias:
        if use_scratch:
            x_ref, w_ref, b_ref, o_ref, acc_ref = refs
        else:
            x_ref, w_ref, b_ref, o_ref = refs
            acc_ref = o_ref
    else:
        if use_scratch:
            x_ref, w_ref, o_ref, acc_ref = refs
        else:
            x_ref, w_ref, o_ref = refs
            acc_ref = o_ref
        b_ref = None

    k = pl.program_id(2)

    @pl.when(k == 0)
    def _():
        acc_ref[...] = jnp.zeros_like(acc_ref)

    acc_ref[...] += jnp.dot(
        x_ref[...], w_ref[...], preferred_element_type=jnp.float32
    )

    @pl.when(k == pl.num_programs(2) - 1)
    def _():
        y = acc_ref[...]
        if use_bias:
            y = y + b_ref[...].astype(jnp.float32)
        o_ref[...] = activation(y).astype(o_ref.dtype)


# ------------------------------ host wrapper ------------------------------- #
def nonlinear_mlp(inputs, weight, bias=None, activation=None,
                  *, compute_dtype=jnp.bfloat16, tm=None, tn=None, tk=None):
    """Pallas equivalent of NonlinearMLP.forward.

    inputs : (..., in_feature)
    weight : (out_feature, in_feature)   -- PyTorch nn.Linear convention
    bias   : (out_feature,) or None
    activation : elementwise callable or None (identity)
    compute_dtype : MXU operand dtype (bf16 default; pass jnp.float32 for
                    f32 parity with PyTorch). Accumulation is always f32.
    """
    if activation is None:
        activation = lambda x: x
    use_bias = bias is not None

    in_feature = inputs.shape[-1]
    out_feature = weight.shape[0]
    lead_shape = inputs.shape[:-1]
    out_dtype = inputs.dtype

    x2d = inputs.reshape(-1, in_feature)                    # (M, K)
    m, k = x2d.shape
    n = out_feature

    if compute_dtype is None:
        compute_dtype = x2d.dtype
    in_bytes = jnp.dtype(compute_dtype).itemsize
    out_bytes = jnp.dtype(out_dtype).itemsize

    # ------------------------- tile selection ------------------------------ #
    m_al = _round_up(m, 8)
    k_al = _round_up(k, 128)
    n_al = _round_up(n, 128)

    vmem_cap = _vmem_capacity_bytes()
    budget = int(0.70 * vmem_cap)

    # Ridge-aware preferred tiles, shrunk to the problem (asymmetric: cover a
    # skinny N/M with one tile so the other operand streams from HBM once).
    tm_e = min(_round_up(tm or (m_al if m_al <= 2048 else 1536), 8), m_al)
    tn_e = min(_round_up(tn or (n_al if n_al <= 2048 else 1536), 128), n_al)
    tk_e = min(_round_up(tk or (k_al if k_al <= 4096 else 1024), 128), k_al)

    def _needed(tm_, tn_, tk_):
        ksteps = -(-k_al // tk_)
        acc = tm_ * tn_ * 4 if (ksteps > 1 and out_bytes != 4) else 0
        bias_v = 2 * tn_ * 4 if use_bias else 0
        return (2 * (tm_ * tk_ + tk_ * tn_) * in_bytes        # dbuf inputs
                + 2 * tm_ * tn_ * out_bytes                   # dbuf output
                + acc + bias_v)

    # Shrink the largest shrinkable tile dim until the working set fits.
    while _needed(tm_e, tn_e, tk_e) > budget:
        cands = []
        if tk_e > 128:
            cands.append(("k", tk_e))
        if tn_e > 128:
            cands.append(("n", tn_e))
        if tm_e > 8:
            cands.append(("m", tm_e))
        if not cands:
            break
        ax = max(cands, key=lambda c: c[1])[0]
        if ax == "k":
            tk_e = max(128, _round_up(tk_e // 2, 128))
        elif ax == "n":
            tn_e = max(128, _round_up(tn_e // 2, 128))
        else:
            tm_e = max(8, _round_up(tm_e // 2, 8))

    m_p = _round_up(m, tm_e)
    k_p = _round_up(k, tk_e)
    n_p = _round_up(n, tn_e)
    grid_m, grid_n, grid_k = m_p // tm_e, n_p // tn_e, k_p // tk_e

    # --------------------------- host-side prep ---------------------------- #
    # (astype/pad are no-ops when already aligned & same dtype; the weight
    # transpose fuses with the cast/pad copy. Callers that reuse a weight
    # across many calls can hoist this under jit once.)
    x_p = _pad2d(x2d.astype(compute_dtype), (m_p, k_p))             # (M_p, K_p)
    w_p = _pad2d(weight.T.astype(compute_dtype), (k_p, n_p))        # (K_p, N_p)

    args = [x_p, w_p]
    if use_bias:
        b_p = _pad2d(bias.astype(jnp.float32).reshape(1, n), (1, n_p))
        args.append(b_p)

    # ----------------------------- specs / grid ---------------------------- #
    if grid_k == 1:
        kernel = functools.partial(
            _mlp_kernel_single, activation=activation, use_bias=use_bias)
        grid = (grid_m, grid_n)
        in_specs = [
            pl.BlockSpec((tm_e, k_p), lambda i, j: (i, 0)),
            pl.BlockSpec((k_p, tn_e), lambda i, j: (0, j)),
        ]
        if use_bias:
            in_specs.append(pl.BlockSpec((1, tn_e), lambda i, j: (0, j)))
        out_specs = pl.BlockSpec((tm_e, tn_e), lambda i, j: (i, j))
        scratch_shapes = []
        dim_sem = ("parallel", "parallel")
    else:
        use_scratch = jnp.dtype(out_dtype) != jnp.dtype(jnp.float32)
        kernel = functools.partial(
            _mlp_kernel_ktiled, activation=activation,
            use_bias=use_bias, use_scratch=use_scratch)
        grid = (grid_m, grid_n, grid_k)
        in_specs = [
            pl.BlockSpec((tm_e, tk_e), lambda i, j, kk: (i, kk)),
            pl.BlockSpec((tk_e, tn_e), lambda i, j, kk: (kk, j)),
        ]
        if use_bias:
            in_specs.append(pl.BlockSpec((1, tn_e), lambda i, j, kk: (0, j)))
        out_specs = pl.BlockSpec((tm_e, tn_e), lambda i, j, kk: (i, j))
        scratch_shapes = (
            [pltpu.VMEM((tm_e, tn_e), jnp.float32)] if use_scratch else [])
        dim_sem = ("parallel", "parallel", "arbitrary")

    # Accurate (re-read aware) advisory cost for the XLA scheduler.
    cost = pl.CostEstimate(
        flops=2 * m_p * n_p * k_p,
        transcendentals=0,
        bytes_accessed=(m_p * k_p * in_bytes) * grid_n
        + (k_p * n_p * in_bytes) * grid_m
        + m_p * n_p * out_bytes
        + (n_p * 4 * grid_m if use_bias else 0),
    )

    vmem_needed = _needed(tm_e, tn_e, tk_e)
    vmem_limit = int(min(vmem_cap,
                         max(int(vmem_needed * 1.25), 32 * 2**20)))

    out_p = pl.pallas_call(
        kernel,
        out_shape=jax.ShapeDtypeStruct((m_p, n_p), out_dtype),
        grid_spec=pltpu.PrefetchScalarGridSpec(
            num_scalar_prefetch=0,
            grid=grid,
            in_specs=in_specs,
            out_specs=out_specs,
            scratch_shapes=scratch_shapes,
        ),
        compiler_params=pltpu.CompilerParams(
            dimension_semantics=dim_sem,
            vmem_limit_bytes=vmem_limit,
        ),
        cost_estimate=cost,
    )(*args)

    return out_p[:m, :n].reshape(*lead_shape, out_feature)


# ------------------------ deterministic param init ------------------------- #
def orthogonal_weight(key, out_feature, in_feature, dtype=jnp.float32):
    """Deterministic orthogonal init (mirrors nn.init.orthogonal_)."""
    rows, cols = out_feature, in_feature
    flat = (max(rows, cols), min(rows, cols))
    a = jax.random.normal(key, flat, dtype=jnp.float32)
    q, r = jnp.linalg.qr(a)
    q = q * jnp.sign(jnp.diag(r))
    if rows < cols:
        q = q.T
    return q[:rows, :cols].astype(dtype)


# ---------------------------------- demo ------------------------------------ #
if __name__ == "__main__":
    key = jax.random.PRNGKey(0)
    k_x, k_w, k_x2, k_w2 = jax.random.split(key, 4)

    batch, seq, in_feature, out_feature = 2, 8, 32, 64

    x = jax.random.normal(k_x, (batch, seq, in_feature), dtype=jnp.float32)
    weight = orthogonal_weight(k_w, out_feature, in_feature)   # (out, in)
    bias = jnp.zeros((out_feature,), dtype=jnp.float32)

    ref = x @ weight.T + bias

    # K-collapsed path, f32 compute (tight check): identity / relu / no-bias.
    out_identity = nonlinear_mlp(x, weight, bias, activation=None,
                                 compute_dtype=jnp.float32)
    out_relu = nonlinear_mlp(x, weight, bias, activation=jax.nn.relu,
                             compute_dtype=jnp.float32)
    out_nobias = nonlinear_mlp(x, weight, None, activation=jax.nn.relu,
                               compute_dtype=jnp.float32)
    # Default bf16 MXU path (loose tolerance).
    out_bf16 = nonlinear_mlp(x, weight, bias, activation=None)

    # K-tiled paths (force tk < K): f32 in-place accumulation and bf16+scratch.
    in_feature2 = 256
    x2 = jax.random.normal(k_x2, (batch, seq, in_feature2), dtype=jnp.float32)
    weight2 = orthogonal_weight(k_w2, out_feature, in_feature2)
    ref2 = x2 @ weight2.T + bias
    out_kt_f32 = nonlinear_mlp(x2, weight2, bias, activation=None,
                               compute_dtype=jnp.float32, tk=128)
    out_kt_bf16 = nonlinear_mlp(x2.astype(jnp.bfloat16), weight2, bias,
                                activation=None, tk=128)

    jax.block_until_ready((out_identity, out_relu, out_nobias, out_bf16,
                           out_kt_f32, out_kt_bf16))

    assert out_identity.shape == (batch, seq, out_feature)
    assert jnp.allclose(out_identity, ref, atol=1e-5)
    assert jnp.allclose(out_relu, jnp.maximum(ref, 0.0), atol=1e-5)
    assert jnp.allclose(out_nobias, jnp.maximum(x @ weight.T, 0.0), atol=1e-5)
    assert jnp.allclose(out_bf16, ref, atol=5e-2, rtol=5e-2)
    assert jnp.allclose(out_kt_f32, ref2, atol=1e-4)
    assert jnp.allclose(out_kt_bf16.astype(jnp.float32), ref2,
                        atol=1e-1, rtol=5e-2)

    print("KERNEL_OK")
</pallas_src>

<mosaic_0001>
module attributes {stable_mosaic.version = 11 : i64} {
  func.func @_mlp_kernel_single(%arg0: i32, %arg1: i32, %arg2: memref<16x128xf32, #tpu.memory_space<vmem>>, %arg3: memref<128x128xf32, #tpu.memory_space<vmem>>, %arg4: memref<1x128xf32, #tpu.memory_space<vmem>>, %arg5: memref<16x128xf32, #tpu.memory_space<vmem>>) attributes {dimension_semantics = [#tpu.dimension_semantics<parallel>, #tpu.dimension_semantics<parallel>], iteration_bounds = array<i64: 1, 1>, scalar_prefetch = 0 : i64, scratch_operands = 0 : i64, tpu.core_type = #tpu.core_type<tc>, window_params = [{transform_indices = @transform_0, window_bounds = array<i64: 16, 128>}, {transform_indices = @transform_1, window_bounds = array<i64: 128, 128>}, {transform_indices = @transform_2, window_bounds = array<i64: 1, 128>}, {transform_indices = @transform_3, window_bounds = array<i64: 16, 128>}]} {
    %c0 = arith.constant 0 : index
    %c0_0 = arith.constant 0 : index
    %0 = vector.load %arg2[%c0, %c0_0] : memref<16x128xf32, #tpu.memory_space<vmem>>, vector<16x128xf32>
    %c0_1 = arith.constant 0 : index
    %c0_2 = arith.constant 0 : index
    %1 = vector.load %arg3[%c0_1, %c0_2] : memref<128x128xf32, #tpu.memory_space<vmem>>, vector<128x128xf32>
    %cst = arith.constant dense<0.000000e+00> : vector<16x128xf32>
    %2 = tpu.matmul %0, %1, %cst {dimension_numbers = #tpu.dot_dimension_numbers<[1], [0], [0], [1], [0, 0, 1, 1], [], []>} : vector<16x128xf32>, vector<128x128xf32>, vector<16x128xf32> -> vector<16x128xf32>
    %c0_3 = arith.constant 0 : index
    %c0_4 = arith.constant 0 : index
    %3 = vector.load %arg4[%c0_3, %c0_4] : memref<1x128xf32, #tpu.memory_space<vmem>>, vector<1x128xf32>
    %4 = vector.broadcast %3 : vector<1x128xf32> to vector<16x128xf32>
    %5 = arith.addf %2, %4 : vector<16x128xf32>
    %c0_5 = arith.constant 0 : index
    %c0_6 = arith.constant 0 : index
    %6 = vector.load %arg5[%c0_5, %c0_6] : memref<16x128xf32, #tpu.memory_space<vmem>>, vector<16x128xf32>
    tpu.vector_store %arg5[%c0_5, %c0_6], %5 {strides = array<i32>} : memref<16x128xf32, #tpu.memory_space<vmem>>, vector<16x128xf32>,
    return
  }
  func.func @transform_0(%arg0: i32, %arg1: i32) -> (i32, i32) {
    %c0_i32 = arith.constant 0 : i32
    %c0_i32_0 = arith.constant 0 : i32
    return %arg0, %c0_i32 : i32, i32
  }
  func.func @transform_1(%arg0: i32, %arg1: i32) -> (i32, i32) {
    %c0_i32 = arith.constant 0 : i32
    %c0_i32_0 = arith.constant 0 : i32
    return %c0_i32, %arg1 : i32, i32
  }
  func.func @transform_2(%arg0: i32, %arg1: i32) -> (i32, i32) {
    %c0_i32 = arith.constant 0 : i32
    %c0_i32_0 = arith.constant 0 : i32
    return %c0_i32, %arg1 : i32, i32
  }
  func.func @transform_3(%arg0: i32, %arg1: i32) -> (i32, i32) {
    %c0_i32 = arith.constant 0 : i32
    return %arg0, %arg1 : i32, i32
  }
}

</mosaic_0001>

<llo_original>
// kernel: tpu_custom_call.1
$region0: #{tpu_custom_call.1}
  #allocation0 [shape = 'u32[]', space=smem, size = 0x4, offset = 0x4, fixed_abs, tag = 'smem constant byte address 0x4 - core index']
  #allocation1 [shape = 'u32[144,128]{1,0:T(1,128)}', space=vmem, size = 0x12000, scoped, tag = 'internal scratch']
  %s0 = inlined_call_operand.hbm [shape: f32[16,128], index: 0, kind: input, shape index: {}]
  %s1 = inlined_call_operand.hbm [shape: f32[128,128], index: 1, kind: input, shape index: {}]
  %s2 = inlined_call_operand.vmem [shape: f32[1,128], index: 2, kind: input, shape index: {}]
  %s3 = inlined_call_operand.hbm [shape: f32[16,128], index: 3, kind: output, shape index: {}]
  %s4 = sld [smem:[#allocation0]]
  $region30: #{tpu_custom_call.1} parent=0
    _
  %s6 = ssub.s32 1, %s4
  %s7 = scalar_select 0, %s6, %s4
  $region1: #{tpu_custom_call.1} parent=0
    #allocation2 [shape = 'u8[8192]{0}', space=vmem, size = 0x2000, scoped, tag = 'input window, operand 0, single buffered']
    #allocation3 [shape = 's32[1]{0}', space=sflag, size = 0x4, scoped, tag = 'scoped memory for tpu_custom_call.1']
    #allocation4 [shape = 's32[1]{0}', space=sflag, size = 0x4, scoped, tag = 'scoped memory for tpu_custom_call.1']
    #allocation5 [shape = 'u8[65536]{0}', space=vmem, size = 0x10000, scoped, tag = 'input window, operand 1, single buffered']
    #allocation6 [shape = 's32[1]{0}', space=sflag, size = 0x4, scoped, tag = 'scoped memory for tpu_custom_call.1']
    #allocation7 [shape = 'u8[8192]{0}', space=vmem, size = 0x2000, scoped, tag = 'output window, operand 0, single buffered']
    %8 = vsyncpa [#allocation3], 0
    %9 = vsyncpa [#allocation6], 0
    %10 = vsyncpa [#allocation4], 0
    // Predicated region
    $region2: #{tpu_custom_call.1} parent=1 // pred_check
      _
    $region3: #{tpu_custom_call.1} parent=1 // pred_check_branch
      %12 = sbr.rel (0) target = $region5
    $region4: #{tpu_custom_call.1} parent=1 // pred_region
      %s14 = ssub.s32 256, 256
      %15 = vsyncadd [#allocation3], %s14
      %s16 = sshll.u32 [#allocation2], 4
      %s17 = int_to_ptr.vmem [resolvable:$true] %s16
      %22 = dma.hbm_to_vmem [thread:$0]  %s0, 256, %s17, [#allocation3], 128, 128, 8
    $region5: #{tpu_custom_call.1} parent=1 // pred_fallthru
      _
    // Predicated region
    $region6: #{tpu_custom_call.1} parent=1 // pred_check
      _
    $region7: #{tpu_custom_call.1} parent=1 // pred_check_branch
      %24 = sbr.rel (0) target = $region9
    $region8: #{tpu_custom_call.1} parent=1 // pred_region
      %s26 = ssub.s32 2048, 2048
      %27 = vsyncadd [#allocation6], %s26
      %s28 = sshll.u32 [#allocation5], 4
      %s29 = int_to_ptr.vmem [resolvable:$true] %s28
      %34 = dma.hbm_to_vmem [thread:$0]  %s1, 2048, %s29, [#allocation6], 128, 128, 8
    $region9: #{tpu_custom_call.1} parent=1 // pred_fallthru
      _
    // Predicated region
    $region10: #{tpu_custom_call.1} parent=1 // pred_check
      _
    $region11: #{tpu_custom_call.1} parent=1 // pred_check_branch
      %36 = sbr.rel (0) target = $region13
    $region12: #{tpu_custom_call.1} parent=1 // pred_region
      _
    $region13: #{tpu_custom_call.1} parent=1 // pred_fallthru
      _
    // Predicated region
    $region14: #{tpu_custom_call.1} parent=1 // pred_check
      _
    $region15: #{tpu_custom_call.1} parent=1 // pred_check_branch
      %38 = sbr.rel (0) target = $region17
    $region16: #{tpu_custom_call.1} parent=1 // pred_region
      %39 = dma.done [#allocation3], 256
    $region17: #{tpu_custom_call.1} parent=1 // pred_fallthru
      _
    // Predicated region
    $region18: #{tpu_custom_call.1} parent=1 // pred_check
      _
    $region19: #{tpu_custom_call.1} parent=1 // pred_check_branch
      %41 = sbr.rel (0) target = $region21
    $region20: #{tpu_custom_call.1} parent=1 // pred_region
      %42 = dma.done [#allocation6], 2048
    $region21: #{tpu_custom_call.1} parent=1 // pred_fallthru
      _
    %v43 = vld [vmem:[#allocation2] sm:$0xff]
    %v44 = vld [vmem:[#allocation2 + $0x8] sm:$0xff]
    %v45 = vld [vmem:[#allocation5] sm:$0xff]
    %v46 = vld [vmem:[#allocation5 + $0x8] sm:$0xff]
    %v47 = vld [vmem:[#allocation5 + $0x10] sm:$0xff]
    %v48 = vld [vmem:[#allocation5 + $0x18] sm:$0xff]
    %v49 = vld [vmem:[#allocation5 + $0x20] sm:$0xff]
    %v50 = vld [vmem:[#allocation5 + $0x28] sm:$0xff]
    %v51 = vld [vmem:[#allocation5 + $0x30] sm:$0xff]
    %v52 = vld [vmem:[#allocation5 + $0x38] sm:$0xff]
    %v53 = vld [vmem:[#allocation5 + $0x40] sm:$0xff]
    %v54 = vld [vmem:[#allocation5 + $0x48] sm:$0xff]
    %v55 = vld [vmem:[#allocation5 + $0x50] sm:$0xff]
    %v56 = vld [vmem:[#allocation5 + $0x58] sm:$0xff]
    %v57 = vld [vmem:[#allocation5 + $0x60] sm:$0xff]
    %v58 = vld [vmem:[#allocation5 + $0x68] sm:$0xff]
    %v59 = vld [vmem:[#allocation5 + $0x70] sm:$0xff]
    %v60 = vld [vmem:[#allocation5 + $0x78] sm:$0xff]
    %v61 = vld [vmem:[%s2] sm:$0x1]
    %v63 = vlaneseq
    %v64 = vshrl.u32 %v63, 7
    %v65 = vsub.s32 0, %v64
    %v66 = vrot.slane %v61, %v65
    %68 = vmatprep.subr.mxu0 0.0
    %69 = vmatpush1.msra.mxu0 %v45
    %70 = vmatprep.subr.mxu0 0.0
    %71 = vmatpush1.msra.mxu0 %v46
    %72 = vmatprep.subr.mxu0 0.0
    %73 = vmatpush1.msra.mxu0 %v47
    %74 = vmatprep.subr.mxu0 0.0
    %75 = vmatpush1.msra.mxu0 %v48
    %76 = vmatprep.subr.mxu0 0.0
    %77 = vmatpush1.msra.mxu0 %v49
    %78 = vmatprep.subr.mxu0 0.0
    %79 = vmatpush1.msra.mxu0 %v50
    %80 = vmatprep.subr.mxu0 0.0
    %81 = vmatpush1.msra.mxu0 %v51
    %82 = vmatprep.subr.mxu0 0.0
    %83 = vmatpush1.msra.mxu0 %v52
    %84 = vmatprep.subr.mxu0 0.0
    %85 = vmatpush1.msra.mxu0 %v53
    %86 = vmatprep.subr.mxu0 0.0
    %87 = vmatpush1.msra.mxu0 %v54
    %88 = vmatprep.subr.mxu0 0.0
    %89 = vmatpush1.msra.mxu0 %v55
    %90 = vmatprep.subr.mxu0 0.0
    %91 = vmatpush1.msra.mxu0 %v56
    %92 = vmatprep.subr.mxu0 0.0
    %93 = vmatpush1.msra.mxu0 %v57
    %94 = vmatprep.subr.mxu0 0.0
    %95 = vmatpush1.msra.mxu0 %v58
    %96 = vmatprep.subr.mxu0 0.0
    %97 = vmatpush1.msra.mxu0 %v59
    %98 = vmatprep.subr.mxu0 0.0
    %99 = vmatpush1.msra.mxu0 %v60
    %100 = vmatprep.subr.mxu0 0.0
    %101 = vmatpush1.msra.mxu0 0.0
    %102 = vmatprep.subr.mxu0 0.0
    %103 = vmatpush1.msra.mxu0 0.0
    %104 = vmatprep.subr.mxu0 0.0
    %105 = vmatpush1.msra.mxu0 0.0
    %106 = vmatprep.subr.mxu0 0.0
    %107 = vmatpush1.msra.mxu0 0.0
    %108 = vmatprep.subr.mxu0 0.0
    %109 = vmatpush1.msra.mxu0 0.0
    %110 = vmatprep.subr.mxu0 0.0
    %111 = vmatpush1.msra.mxu0 0.0
    %112 = vmatprep.subr.mxu0 0.0
    %113 = vmatpush1.msra.mxu0 0.0
    %114 = vmatprep.subr.mxu0 0.0
    %115 = vmatpush1.msra.mxu0 0.0
    %116 = vmatprep.subr.mxu0 0.0
    %117 = vmatpush1.msra.mxu0 0.0
    %118 = vmatprep.subr.mxu0 0.0
    %119 = vmatpush1.msra.mxu0 0.0
    %120 = vmatprep.subr.mxu0 0.0
    %121 = vmatpush1.msra.mxu0 0.0
    %122 = vmatprep.subr.mxu0 0.0
    %123 = vmatpush1.msra.mxu0 0.0
    %124 = vmatprep.subr.mxu0 0.0
    %125 = vmatpush1.msra.mxu0 0.0
    %126 = vmatprep.subr.mxu0 0.0
    %127 = vmatpush1.msra.mxu0 0.0
    %128 = vmatprep.subr.mxu0 0.0
    %129 = vmatpush1.msra.mxu0 0.0
    %130 = vmatprep.subr.mxu0 0.0
    %131 = vmatpush1.msra.mxu0 0.0
    %132 = vmatprep.mubr.f32.mxu0 0.0
    %133 = vmatmul.mubr.f32.gmra.mrb[0].mxu0 %v43
    %v134 = vpop.f32.mrb[0].mxu0
    %v135 = vadd.f32 %v66, %v134
    %v136 = vpop.f32.mrb[0].mxu0
    %137 = vmatprep.mubr.f32.mxu0 0.0
    %138 = vmatmul.mubr.f32.gmra.mrb[0].mxu0 %v44
    %v139 = vpop.f32.mrb[0].mxu0
    %v140 = vadd.f32 %v66, %v139
    %v141 = vpop.f32.mrb[0].mxu0
    %142 = vdwg.mxu0
    %143 = vst [vmem:[#allocation7] sm:$0xff] %v135
    %144 = vst [vmem:[#allocation7 + $0x8] sm:$0xff] %v140
    // Predicated region
    $region22: #{tpu_custom_call.1} parent=1 // pred_check
      _
    $region23: #{tpu_custom_call.1} parent=1 // pred_check_branch
      %146 = sbr.rel (0) target = $region25
    $region24: #{tpu_custom_call.1} parent=1 // pred_region
      %s148 = ssub.s32 256, 256
      %149 = vsyncadd [#allocation4], %s148
      %s150 = sshll.u32 [#allocation7], 4
      %s151 = int_to_ptr.vmem [resolvable:$true] %s150
      %156 = dma.vmem_to_hbm [thread:$0]  %s151, 256, %s3, [#allocation4], 128, 128, 8
    $region25: #{tpu_custom_call.1} parent=1 // pred_fallthru
      _
    // Predicated region
    $region26: #{tpu_custom_call.1} parent=1 // pred_check
      _
    $region27: #{tpu_custom_call.1} parent=1 // pred_check_branch
      %158 = sbr.rel (0) target = $region29
    $region28: #{tpu_custom_call.1} parent=1 // pred_region
      %159 = dma.done [#allocation4], 256
    $region29: #{tpu_custom_call.1} parent=1 // pred_fallthru
      _
    %160 = vsyncpa [#allocation3], 1
    %161 = vsyncpa [#allocation6], 1
    %162 = vsyncpa [#allocation4], 1

</llo_original>
